<compile_context>
chip_gen: v6e
topology: v6e:2x2x1
jax: 0.10.0
libtpu: 0.0.40
codegen_flags: <defaults>
</compile_context>

<pallas_src>
import functools

import jax
import jax.numpy as jnp
from jax.experimental import pallas as pl
from jax.experimental.pallas import tpu as pltpu


def _round_up(x, m):
    return ((x + m - 1) // m) * m


# ----------------------------------------------------------------------------
# Fused CNNHead kernel
# ----------------------------------------------------------------------------
def _stack_taps(x, K, dilation, L_out):
    """im2col over taps: x (C_in, L_in) -> (K*C_in, L_out), row k*C_in+ci = x[ci, l+k*d]."""
    if K == 1:
        return x[:, :L_out]
    return jnp.concatenate(
        [x[:, k * dilation: k * dilation + L_out] for k in range(K)], axis=0)


def _cnn_head_kernel(*refs, dilated_cfgs, smooth_K, smooth_pad, leaky_slope, eps):
    # refs = (x_ref,
    #         [w_packed_ref, affine_ref]   per dilated layer   (affine = [b|gamma|beta], (C_out,3))
    #         smooth_w_ref, smooth_b_ref,                       (hid, smooth_K*hid), (hid, 1)
    #         out_w_ref, out_b_ref,                             (cla, hid), (cla, 1)
    #         o_ref)                                            (1, C_pad, L_pad)
    x_ref = refs[0]
    o_ref = refs[-1]
    w_refs = refs[1:-1]

    h = x_ref[0].astype(jnp.float32)                      # (C_in, L_in)
    L = h.shape[1]
    idx = 0

    # ---- dilated blocks: Conv1d (valid) -> bias -> LeakyReLU -> channel LayerNorm
    for (K, dilation) in dilated_cfgs:
        w = w_refs[idx][...].astype(jnp.float32)          # (C_out, K*C_in)
        aff = w_refs[idx + 1][...].astype(jnp.float32)    # (C_out, 3)
        idx += 2
        L = L - dilation * (K - 1)
        taps = _stack_taps(h, K, dilation, L)             # (K*C_in, L)
        acc = jnp.dot(w, taps, preferred_element_type=jnp.float32)
        acc = acc + aff[:, 0:1]                           # bias
        acc = jnp.where(acc >= 0, acc, leaky_slope * acc) # LeakyReLU
        # TransposeLayerNorm: normalize over channels at every position
        mean = jnp.mean(acc, axis=0, keepdims=True)       # (1, L)
        var = jnp.mean((acc - mean) ** 2, axis=0, keepdims=True)
        h = (acc - mean) * jax.lax.rsqrt(var + eps) * aff[:, 1:2] + aff[:, 2:3]

    # nn.Dropout: identity at inference time.

    # ---- smooth conv with in-kernel replicate padding, then LeakyReLU
    sw = w_refs[idx][...].astype(jnp.float32)             # (hid, smooth_K*hid)
    sb = w_refs[idx + 1][...].astype(jnp.float32)         # (hid, 1)
    ow = w_refs[idx + 2][...].astype(jnp.float32)         # (cla, hid)
    ob = w_refs[idx + 3][...].astype(jnp.float32)         # (cla, 1)

    C = h.shape[0]
    if smooth_pad > 0:
        left = jnp.broadcast_to(h[:, 0:1], (C, smooth_pad))
        right = jnp.broadcast_to(h[:, L - 1:L], (C, smooth_pad))
        h = jnp.concatenate([left, h, right], axis=1)     # (C, L + 2*pad)
    L_out = L + 2 * smooth_pad - (smooth_K - 1)
    taps = _stack_taps(h, smooth_K, 1, L_out)             # (smooth_K*hid, L_out)
    acc = jnp.dot(sw, taps, preferred_element_type=jnp.float32) + sb
    acc = jnp.where(acc >= 0, acc, leaky_slope * acc)

    # ---- 1x1 output conv
    y = jnp.dot(ow, acc, preferred_element_type=jnp.float32) + ob   # (cla, L_out)

    # ---- pad to the (sublane, lane)-dense output tile -> one unmasked vst
    cla = y.shape[0]
    _, c_pad, l_pad = o_ref.shape
    if l_pad > L_out:
        y = jnp.concatenate(
            [y, jnp.zeros((cla, l_pad - L_out), jnp.float32)], axis=1)
    if c_pad > cla:
        y = jnp.concatenate(
            [y, jnp.zeros((c_pad - cla, l_pad), jnp.float32)], axis=0)
    o_ref[0] = y.astype(o_ref.dtype)


# ----------------------------------------------------------------------------
# Parameter init (deterministic, PyTorch-default-style uniform bounds) + packing
# ----------------------------------------------------------------------------
def init_cnn_head(key, *, input_size, num_classes, dilation_base,
                  hidden_channels, smooth, context_size, kernel_size):
    channels = [input_size] + list(hidden_channels)       # mirrors .insert(0, input_size)

    def conv_init(k, c_out, c_in, ks):
        kw, kb = jax.random.split(k)
        bound = 1.0 / (c_in * ks) ** 0.5
        w = jax.random.uniform(kw, (c_out, c_in, ks), jnp.float32, -bound, bound)
        b = jax.random.uniform(kb, (c_out,), jnp.float32, -bound, bound)
        return w, b

    def pack_w(w):                                        # (C_out, C_in, K) -> (C_out, K*C_in)
        c_out, c_in, ks = w.shape
        return jnp.transpose(w, (0, 2, 1)).reshape(c_out, ks * c_in)

    keys = jax.random.split(key, (len(channels) - 1) + 2)
    arrays, cfgs, raw = [], [], {"dilated": [], "smooth": None, "out": None}
    for i in range(1, len(channels)):
        ks = context_size if i == 1 else kernel_size
        dilation = int(round(dilation_base ** (i - 1)))
        w, b = conv_init(keys[i - 1], channels[i], channels[i - 1], ks)
        gamma = jnp.ones((channels[i],), jnp.float32)     # LayerNorm affine init
        beta = jnp.zeros((channels[i],), jnp.float32)
        arrays.append(pack_w(w))
        arrays.append(jnp.stack([b, gamma, beta], axis=1))            # (C_out, 3)
        cfgs.append((ks, dilation))
        raw["dilated"].append({"w": w, "b": b, "gamma": gamma, "beta": beta,
                               "dilation": dilation})
    hid = channels[-1]
    w, b = conv_init(keys[-2], hid, hid, smooth)
    arrays.append(pack_w(w))
    arrays.append(b.reshape(hid, 1))
    raw["smooth"] = {"w": w, "b": b}
    w, b = conv_init(keys[-1], num_classes, hid, 1)
    arrays.append(w.reshape(num_classes, hid))                        # 1x1 conv weight
    arrays.append(b.reshape(num_classes, 1))
    raw["out"] = {"w": w, "b": b}

    return {"arrays": arrays, "dilated_cfgs": tuple(cfgs), "smooth": smooth,
            "num_classes": num_classes, "raw": raw}


# ----------------------------------------------------------------------------
# Fused forward (norm='lnorm', inference mode)
# ----------------------------------------------------------------------------
def cnn_head_forward(x, params, *, leaky_slope=0.01, eps=1e-5):
    N, C_in, L_in = x.shape
    cfgs = params["dilated_cfgs"]
    smooth = params["smooth"]
    num_classes = params["num_classes"]
    pad = smooth // 2

    L = L_in
    for (K, d) in cfgs:
        L -= d * (K - 1)
    assert L > 0
    L_out = L + 2 * pad - (smooth - 1)
    assert L_out > 0

    # Dense store tile: pad classes to a sublane multiple (8) and length to a
    # lane multiple (128); the true result is sliced out afterwards.
    C_pad = _round_up(num_classes, 8)
    L_out_pad = _round_up(L_out, 128)

    arrays = params["arrays"]
    kernel = functools.partial(
        _cnn_head_kernel, dilated_cfgs=cfgs, smooth_K=smooth, smooth_pad=pad,
        leaky_slope=leaky_slope, eps=eps)

    in_specs = [pl.BlockSpec((1, C_in, L_in), lambda n: (n, 0, 0))]   # per-batch tile
    for a in arrays:                                                  # full (tiny) weights
        in_specs.append(pl.BlockSpec(a.shape, lambda n: (0, 0)))

    out = pl.pallas_call(
        kernel,
        out_shape=jax.ShapeDtypeStruct((N, C_pad, L_out_pad), x.dtype),
        grid=(N,),
        in_specs=in_specs,
        out_specs=pl.BlockSpec((1, C_pad, L_out_pad), lambda n: (n, 0, 0)),
        compiler_params=pltpu.CompilerParams(
            dimension_semantics=("parallel",)),   # splits batch over TCs on v7x
    )(x, *arrays)
    return out[:, :num_classes, :L_out]


# ----------------------------------------------------------------------------
# Pure-JAX reference (for correctness check against the fused kernel)
# ----------------------------------------------------------------------------
def cnn_head_reference(x, params, *, leaky_slope=0.01, eps=1e-5):
    def conv1d(h, w, b, dilation=1, padding="VALID"):
        y = jax.lax.conv_general_dilated(
            h, w, window_strides=(1,), padding=padding,
            rhs_dilation=(dilation,),
            dimension_numbers=("NCH", "OIH", "NCH"))
        return y + b[None, :, None]

    h = x
    for p in params["raw"]["dilated"]:
        h = conv1d(h, p["w"], p["b"], dilation=p["dilation"])
        h = jnp.where(h >= 0, h, leaky_slope * h)
        mean = jnp.mean(h, axis=1, keepdims=True)
        var = jnp.mean((h - mean) ** 2, axis=1, keepdims=True)
        h = (h - mean) * jax.lax.rsqrt(var + eps)
        h = h * p["gamma"][None, :, None] + p["beta"][None, :, None]
    pad = params["smooth"] // 2
    h = jnp.pad(h, ((0, 0), (0, 0), (pad, pad)), mode="edge")
    p = params["raw"]["smooth"]
    h = conv1d(h, p["w"], p["b"])
    h = jnp.where(h >= 0, h, leaky_slope * h)
    p = params["raw"]["out"]
    return conv1d(h, p["w"], p["b"])


# ----------------------------------------------------------------------------
if __name__ == "__main__":
    # CNNHead hyperparameters (small, consistent with the module)
    input_size = 4
    num_classes = 5
    dilation_base = 2
    hidden_channels = [8, 16]
    smooth = 3
    context_size = 5
    kernel_size = 3
    # norm='lnorm', dropout=0.1 (identity at inference)
    # TODO(synk): nn.Dropout train-mode masking not implemented (inference path only).

    key = jax.random.PRNGKey(0)
    k_params, k_x = jax.random.split(key)

    params = init_cnn_head(
        k_params, input_size=input_size, num_classes=num_classes,
        dilation_base=dilation_base, hidden_channels=hidden_channels,
        smooth=smooth, context_size=context_size, kernel_size=kernel_size)

    N, L = 2, 32
    x = jax.random.normal(k_x, (N, input_size, L), jnp.float32)   # NCL, like torch NCW

    y = cnn_head_forward(x, params)
    y = jax.block_until_ready(y)

    # length: 32 -(ks5,d1)-> 28 -(ks3,d2)-> 24 -(smooth, replicate pad)-> 24 -(1x1)-> 24
    assert y.shape == (N, num_classes, 24), y.shape
    assert bool(jnp.all(jnp.isfinite(y)))

    y_ref = jax.block_until_ready(cnn_head_reference(x, params))
    assert jnp.allclose(y, y_ref, rtol=5e-2, atol=5e-2), float(jnp.max(jnp.abs(y - y_ref)))

    print("KERNEL_OK")
</pallas_src>

<mosaic_0001>
module attributes {stable_mosaic.version = 11 : i64} {
  func.func @_cnn_head_kernel(%arg0: i32, %arg1: memref<1x4x32xf32, #tpu.memory_space<vmem>>, %arg2: memref<8x20xf32, #tpu.memory_space<vmem>>, %arg3: memref<8x3xf32, #tpu.memory_space<vmem>>, %arg4: memref<16x24xf32, #tpu.memory_space<vmem>>, %arg5: memref<16x3xf32, #tpu.memory_space<vmem>>, %arg6: memref<16x48xf32, #tpu.memory_space<vmem>>, %arg7: memref<16x1xf32, #tpu.memory_space<vmem>>, %arg8: memref<5x16xf32, #tpu.memory_space<vmem>>, %arg9: memref<5x1xf32, #tpu.memory_space<vmem>>, %arg10: memref<1x8x128xf32, #tpu.memory_space<vmem>>) attributes {dimension_semantics = [#tpu.dimension_semantics<parallel>], iteration_bounds = array<i64: 2>, scalar_prefetch = 0 : i64, scratch_operands = 0 : i64, tpu.core_type = #tpu.core_type<tc>, window_params = [{transform_indices = @transform_0, window_bounds = array<i64: 1, 4, 32>}, {pipeline_mode = #tpu.pipeline_mode<synchronous>, transform_indices = @transform_1, window_bounds = array<i64: 8, 20>}, {pipeline_mode = #tpu.pipeline_mode<synchronous>, transform_indices = @transform_2, window_bounds = array<i64: 8, 3>}, {pipeline_mode = #tpu.pipeline_mode<synchronous>, transform_indices = @transform_3, window_bounds = array<i64: 16, 24>}, {pipeline_mode = #tpu.pipeline_mode<synchronous>, transform_indices = @transform_4, window_bounds = array<i64: 16, 3>}, {pipeline_mode = #tpu.pipeline_mode<synchronous>, transform_indices = @transform_5, window_bounds = array<i64: 16, 48>}, {pipeline_mode = #tpu.pipeline_mode<synchronous>, transform_indices = @transform_6, window_bounds = array<i64: 16, 1>}, {pipeline_mode = #tpu.pipeline_mode<synchronous>, transform_indices = @transform_7, window_bounds = array<i64: 5, 16>}, {pipeline_mode = #tpu.pipeline_mode<synchronous>, transform_indices = @transform_8, window_bounds = array<i64: 5, 1>}, {transform_indices = @transform_9, window_bounds = array<i64: 1, 8, 128>}]} {
    %c0 = arith.constant 0 : index
    %c0_0 = arith.constant 0 : index
    %c0_1 = arith.constant 0 : index
    %0 = vector.load %arg1[%c0, %c0_0, %c0_1] : memref<1x4x32xf32, #tpu.memory_space<vmem>>, vector<1x4x32xf32>
    %1 = vector.shape_cast %0 : vector<1x4x32xf32> to vector<4x32xf32>
    %c0_2 = arith.constant 0 : index
    %c0_3 = arith.constant 0 : index
    %2 = vector.load %arg2[%c0_2, %c0_3] : memref<8x20xf32, #tpu.memory_space<vmem>>, vector<8x20xf32>
    %c0_4 = arith.constant 0 : index
    %c0_5 = arith.constant 0 : index
    %3 = vector.load %arg3[%c0_4, %c0_5] : memref<8x3xf32, #tpu.memory_space<vmem>>, vector<8x3xf32>
    %4 = vector.extract_strided_slice %1 {offsets = [0, 0], sizes = [4, 28], strides = [1, 1]} : vector<4x32xf32> to vector<4x28xf32>
    %5 = vector.extract_strided_slice %1 {offsets = [0, 1], sizes = [4, 28], strides = [1, 1]} : vector<4x32xf32> to vector<4x28xf32>
    %6 = vector.extract_strided_slice %1 {offsets = [0, 2], sizes = [4, 28], strides = [1, 1]} : vector<4x32xf32> to vector<4x28xf32>
    %7 = vector.extract_strided_slice %1 {offsets = [0, 3], sizes = [4, 28], strides = [1, 1]} : vector<4x32xf32> to vector<4x28xf32>
    %8 = vector.extract_strided_slice %1 {offsets = [0, 4], sizes = [4, 28], strides = [1, 1]} : vector<4x32xf32> to vector<4x28xf32>
    %9 = tpu.concatenate %4, %5, %6, %7, %8 in 0 : vector<4x28xf32>, vector<4x28xf32>, vector<4x28xf32>, vector<4x28xf32>, vector<4x28xf32> -> vector<20x28xf32>
    %cst = arith.constant dense<0.000000e+00> : vector<8x28xf32>
    %10 = tpu.matmul %2, %9, %cst {dimension_numbers = #tpu.dot_dimension_numbers<[1], [0], [0], [1], [0, 0, 1, 1], [], []>} : vector<8x20xf32>, vector<20x28xf32>, vector<8x28xf32> -> vector<8x28xf32>
    %11 = vector.extract_strided_slice %3 {offsets = [0, 0], sizes = [8, 1], strides = [1, 1]} : vector<8x3xf32> to vector<8x1xf32>
    %12 = vector.broadcast %11 : vector<8x1xf32> to vector<8x28xf32>
    %13 = arith.addf %10, %12 : vector<8x28xf32>
    %cst_6 = arith.constant 0.000000e+00 : f32
    %14 = vector.broadcast %cst_6 : f32 to vector<8x28xf32>
    %15 = arith.cmpf oge, %13, %14 : vector<8x28xf32>
    %cst_7 = arith.constant 0.00999999977 : f32
    %16 = vector.broadcast %cst_7 : f32 to vector<8x28xf32>
    %17 = arith.mulf %16, %13 : vector<8x28xf32>
    %18 = arith.select %15, %13, %17 : vector<8x28xi1>, vector<8x28xf32>
    %cst_8 = arith.constant dense<0.000000e+00> : vector<28xf32>
    %19 = vector.multi_reduction <add>, %18, %cst_8 [0] : vector<8x28xf32> to vector<28xf32>
    %20 = vector.shape_cast %19 : vector<28xf32> to vector<1x28xf32>
    %cst_9 = arith.constant 8.000000e+00 : f32
    %21 = vector.broadcast %cst_9 : f32 to vector<1x28xf32>
    %22 = arith.divf %20, %21 : vector<1x28xf32>
    %23 = vector.broadcast %22 : vector<1x28xf32> to vector<8x28xf32>
    %24 = arith.subf %18, %23 : vector<8x28xf32>
    %25 = arith.mulf %24, %24 : vector<8x28xf32>
    %cst_10 = arith.constant dense<0.000000e+00> : vector<28xf32>
    %26 = vector.multi_reduction <add>, %25, %cst_10 [0] : vector<8x28xf32> to vector<28xf32>
    %27 = vector.shape_cast %26 : vector<28xf32> to vector<1x28xf32>
    %cst_11 = arith.constant 8.000000e+00 : f32
    %28 = vector.broadcast %cst_11 : f32 to vector<1x28xf32>
    %29 = arith.divf %27, %28 : vector<1x28xf32>
    %30 = vector.broadcast %22 : vector<1x28xf32> to vector<8x28xf32>
    %31 = arith.subf %18, %30 : vector<8x28xf32>
    %cst_12 = arith.constant 9.99999974E-6 : f32
    %32 = vector.broadcast %cst_12 : f32 to vector<1x28xf32>
    %33 = arith.addf %29, %32 : vector<1x28xf32>
    %34 = math.rsqrt %33 : vector<1x28xf32>
    %35 = vector.broadcast %34 : vector<1x28xf32> to vector<8x28xf32>
    %36 = arith.mulf %31, %35 : vector<8x28xf32>
    %37 = vector.extract_strided_slice %3 {offsets = [0, 1], sizes = [8, 1], strides = [1, 1]} : vector<8x3xf32> to vector<8x1xf32>
    %38 = vector.broadcast %37 : vector<8x1xf32> to vector<8x28xf32>
    %39 = arith.mulf %36, %38 : vector<8x28xf32>
    %40 = vector.extract_strided_slice %3 {offsets = [0, 2], sizes = [8, 1], strides = [1, 1]} : vector<8x3xf32> to vector<8x1xf32>
    %41 = vector.broadcast %40 : vector<8x1xf32> to vector<8x28xf32>
    %42 = arith.addf %39, %41 : vector<8x28xf32>
    %c0_13 = arith.constant 0 : index
    %c0_14 = arith.constant 0 : index
    %43 = vector.load %arg4[%c0_13, %c0_14] : memref<16x24xf32, #tpu.memory_space<vmem>>, vector<16x24xf32>
    %c0_15 = arith.constant 0 : index
    %c0_16 = arith.constant 0 : index
    %44 = vector.load %arg5[%c0_15, %c0_16] : memref<16x3xf32, #tpu.memory_space<vmem>>, vector<16x3xf32>
    %45 = vector.extract_strided_slice %42 {offsets = [0, 0], sizes = [8, 24], strides = [1, 1]} : vector<8x28xf32> to vector<8x24xf32>
    %46 = vector.extract_strided_slice %42 {offsets = [0, 2], sizes = [8, 24], strides = [1, 1]} : vector<8x28xf32> to vector<8x24xf32>
    %47 = vector.extract_strided_slice %42 {offsets = [0, 4], sizes = [8, 24], strides = [1, 1]} : vector<8x28xf32> to vector<8x24xf32>
    %48 = tpu.concatenate %45, %46, %47 in 0 : vector<8x24xf32>, vector<8x24xf32>, vector<8x24xf32> -> vector<24x24xf32>
    %cst_17 = arith.constant dense<0.000000e+00> : vector<16x24xf32>
    %49 = tpu.matmul %43, %48, %cst_17 {dimension_numbers = #tpu.dot_dimension_numbers<[1], [0], [0], [1], [0, 0, 1, 1], [], []>} : vector<16x24xf32>, vector<24x24xf32>, vector<16x24xf32> -> vector<16x24xf32>
    %50 = vector.extract_strided_slice %44 {offsets = [0, 0], sizes = [16, 1], strides = [1, 1]} : vector<16x3xf32> to vector<16x1xf32>
    %51 = vector.broadcast %50 : vector<16x1xf32> to vector<16x24xf32>
    %52 = arith.addf %49, %51 : vector<16x24xf32>
    %cst_18 = arith.constant 0.000000e+00 : f32
    %53 = vector.broadcast %cst_18 : f32 to vector<16x24xf32>
    %54 = arith.cmpf oge, %52, %53 : vector<16x24xf32>
    %cst_19 = arith.constant 0.00999999977 : f32
    %55 = vector.broadcast %cst_19 : f32 to vector<16x24xf32>
    %56 = arith.mulf %55, %52 : vector<16x24xf32>
    %57 = arith.select %54, %52, %56 : vector<16x24xi1>, vector<16x24xf32>
    %cst_20 = arith.constant dense<0.000000e+00> : vector<24xf32>
    %58 = vector.multi_reduction <add>, %57, %cst_20 [0] : vector<16x24xf32> to vector<24xf32>
    %59 = vector.shape_cast %58 : vector<24xf32> to vector<1x24xf32>
    %cst_21 = arith.constant 1.600000e+01 : f32
    %60 = vector.broadcast %cst_21 : f32 to vector<1x24xf32>
    %61 = arith.divf %59, %60 : vector<1x24xf32>
    %62 = vector.broadcast %61 : vector<1x24xf32> to vector<16x24xf32>
    %63 = arith.subf %57, %62 : vector<16x24xf32>
    %64 = arith.mulf %63, %63 : vector<16x24xf32>
    %cst_22 = arith.constant dense<0.000000e+00> : vector<24xf32>
    %65 = vector.multi_reduction <add>, %64, %cst_22 [0] : vector<16x24xf32> to vector<24xf32>
    %66 = vector.shape_cast %65 : vector<24xf32> to vector<1x24xf32>
    %cst_23 = arith.constant 1.600000e+01 : f32
    %67 = vector.broadcast %cst_23 : f32 to vector<1x24xf32>
    %68 = arith.divf %66, %67 : vector<1x24xf32>
    %69 = vector.broadcast %61 : vector<1x24xf32> to vector<16x24xf32>
    %70 = arith.subf %57, %69 : vector<16x24xf32>
    %cst_24 = arith.constant 9.99999974E-6 : f32
    %71 = vector.broadcast %cst_24 : f32 to vector<1x24xf32>
    %72 = arith.addf %68, %71 : vector<1x24xf32>
    %73 = math.rsqrt %72 : vector<1x24xf32>
    %74 = vector.broadcast %73 : vector<1x24xf32> to vector<16x24xf32>
    %75 = arith.mulf %70, %74 : vector<16x24xf32>
    %76 = vector.extract_strided_slice %44 {offsets = [0, 1], sizes = [16, 1], strides = [1, 1]} : vector<16x3xf32> to vector<16x1xf32>
    %77 = vector.broadcast %76 : vector<16x1xf32> to vector<16x24xf32>
    %78 = arith.mulf %75, %77 : vector<16x24xf32>
    %79 = vector.extract_strided_slice %44 {offsets = [0, 2], sizes = [16, 1], strides = [1, 1]} : vector<16x3xf32> to vector<16x1xf32>
    %80 = vector.broadcast %79 : vector<16x1xf32> to vector<16x24xf32>
    %81 = arith.addf %78, %80 : vector<16x24xf32>
    %c0_25 = arith.constant 0 : index
    %c0_26 = arith.constant 0 : index
    %82 = vector.load %arg6[%c0_25, %c0_26] : memref<16x48xf32, #tpu.memory_space<vmem>>, vector<16x48xf32>
    %c0_27 = arith.constant 0 : index
    %c0_28 = arith.constant 0 : index
    %83 = vector.load %arg7[%c0_27, %c0_28] : memref<16x1xf32, #tpu.memory_space<vmem>>, vector<16x1xf32>
    %c0_29 = arith.constant 0 : index
    %c0_30 = arith.constant 0 : index
    %84 = vector.load %arg8[%c0_29, %c0_30] : memref<5x16xf32, #tpu.memory_space<vmem>>, vector<5x16xf32>
    %c0_31 = arith.constant 0 : index
    %c0_32 = arith.constant 0 : index
    %85 = vector.load %arg9[%c0_31, %c0_32] : memref<5x1xf32, #tpu.memory_space<vmem>>, vector<5x1xf32>
    %86 = vector.extract_strided_slice %81 {offsets = [0, 0], sizes = [16, 1], strides = [1, 1]} : vector<16x24xf32> to vector<16x1xf32>
    %87 = vector.extract_strided_slice %81 {offsets = [0, 23], sizes = [16, 1], strides = [1, 1]} : vector<16x24xf32> to vector<16x1xf32>
    %88 = tpu.concatenate %86, %81, %87 in 1 : vector<16x1xf32>, vector<16x24xf32>, vector<16x1xf32> -> vector<16x26xf32>
    %89 = vector.extract_strided_slice %88 {offsets = [0, 0], sizes = [16, 24], strides = [1, 1]} : vector<16x26xf32> to vector<16x24xf32>
    %90 = vector.extract_strided_slice %88 {offsets = [0, 1], sizes = [16, 24], strides = [1, 1]} : vector<16x26xf32> to vector<16x24xf32>
    %91 = vector.extract_strided_slice %88 {offsets = [0, 2], sizes = [16, 24], strides = [1, 1]} : vector<16x26xf32> to vector<16x24xf32>
    %92 = tpu.concatenate %89, %90, %91 in 0 : vector<16x24xf32>, vector<16x24xf32>, vector<16x24xf32> -> vector<48x24xf32>
    %cst_33 = arith.constant dense<0.000000e+00> : vector<16x24xf32>
    %93 = tpu.matmul %82, %92, %cst_33 {dimension_numbers = #tpu.dot_dimension_numbers<[1], [0], [0], [1], [0, 0, 1, 1], [], []>} : vector<16x48xf32>, vector<48x24xf32>, vector<16x24xf32> -> vector<16x24xf32>
    %94 = vector.broadcast %83 : vector<16x1xf32> to vector<16x24xf32>
    %95 = arith.addf %93, %94 : vector<16x24xf32>
    %cst_34 = arith.constant 0.000000e+00 : f32
    %96 = vector.broadcast %cst_34 : f32 to vector<16x24xf32>
    %97 = arith.cmpf oge, %95, %96 : vector<16x24xf32>
    %cst_35 = arith.constant 0.00999999977 : f32
    %98 = vector.broadcast %cst_35 : f32 to vector<16x24xf32>
    %99 = arith.mulf %98, %95 : vector<16x24xf32>
    %100 = arith.select %97, %95, %99 : vector<16x24xi1>, vector<16x24xf32>
    %cst_36 = arith.constant dense<0.000000e+00> : vector<5x24xf32>
    %101 = tpu.matmul %84, %100, %cst_36 {dimension_numbers = #tpu.dot_dimension_numbers<[1], [0], [0], [1], [0, 0, 1, 1], [], []>} : vector<5x16xf32>, vector<16x24xf32>, vector<5x24xf32> -> vector<5x24xf32>
    %102 = vector.broadcast %85 : vector<5x1xf32> to vector<5x24xf32>
    %103 = arith.addf %101, %102 : vector<5x24xf32>
    %cst_37 = arith.constant 0.000000e+00 : f32
    %104 = vector.broadcast %cst_37 : f32 to vector<5x104xf32>
    %105 = tpu.concatenate %103, %104 in 1 : vector<5x24xf32>, vector<5x104xf32> -> vector<5x128xf32>
    %cst_38 = arith.constant 0.000000e+00 : f32
    %106 = vector.broadcast %cst_38 : f32 to vector<3x128xf32>
    %107 = tpu.concatenate %105, %106 in 0 : vector<5x128xf32>, vector<3x128xf32> -> vector<8x128xf32>
    %c0_39 = arith.constant 0 : index
    %c0_40 = arith.constant 0 : index
    %c0_41 = arith.constant 0 : index
    %108 = vector.load %arg10[%c0_39, %c0_40, %c0_41] : memref<1x8x128xf32, #tpu.memory_space<vmem>>, vector<1x8x128xf32>
    %109 = vector.shape_cast %108 : vector<1x8x128xf32> to vector<8x128xf32>
    %110 = vector.shape_cast %107 : vector<8x128xf32> to vector<1x8x128xf32>
    tpu.vector_store %arg10[%c0_39, %c0_40, %c0_41], %110 {strides = array<i32>} : memref<1x8x128xf32, #tpu.memory_space<vmem>>, vector<1x8x128xf32>,
    return
  }
  func.func @transform_0(%arg0: i32) -> (i32, i32, i32) {
    %c0_i32 = arith.constant 0 : i32
    %c0_i32_0 = arith.constant 0 : i32
    %c0_i32_1 = arith.constant 0 : i32
    return %arg0, %c0_i32, %c0_i32_0 : i32, i32, i32
  }
  func.func @transform_1(%arg0: i32) -> (i32, i32) {
    %c0_i32 = arith.constant 0 : i32
    %c0_i32_0 = arith.constant 0 : i32
    %c0_i32_1 = arith.constant 0 : i32
    return %c0_i32, %c0_i32_0 : i32, i32
  }
  func.func @transform_2(%arg0: i32) -> (i32, i32) {
    %c0_i32 = arith.constant 0 : i32
    %c0_i32_0 = arith.constant 0 : i32
    %c0_i32_1 = arith.constant 0 : i32
    return %c0_i32, %c0_i32_0 : i32, i32
  }
  func.func @transform_3(%arg0: i32) -> (i32, i32) {
    %c0_i32 = arith.constant 0 : i32
    %c0_i32_0 = arith.constant 0 : i32
    %c0_i32_1 = arith.constant 0 : i32
    return %c0_i32, %c0_i32_0 : i32, i32
  }
  func.func @transform_4(%arg0: i32) -> (i32, i32) {
    %c0_i32 = arith.constant 0 : i32
    %c0_i32_0 = arith.constant 0 : i32
    %c0_i32_1 = arith.constant 0 : i32
    return %c0_i32, %c0_i32_0 : i32, i32
  }
  func.func @transform_5(%arg0: i32) -> (i32, i32) {
    %c0_i32 = arith.constant 0 : i32
    %c0_i32_0 = arith.constant 0 : i32
    %c0_i32_1 = arith.constant 0 : i32
    return %c0_i32, %c0_i32_0 : i32, i32
  }
  func.func @transform_6(%arg0: i32) -> (i32, i32) {
    %c0_i32 = arith.constant 0 : i32
    %c0_i32_0 = arith.constant 0 : i32
    %c0_i32_1 = arith.constant 0 : i32
    return %c0_i32, %c0_i32_0 : i32, i32
  }
  func.func @transform_7(%arg0: i32) -> (i32, i32) {
    %c0_i32 = arith.constant 0 : i32
    %c0_i32_0 = arith.constant 0 : i32
    %c0_i32_1 = arith.constant 0 : i32
    return %c0_i32, %c0_i32_0 : i32, i32
  }
  func.func @transform_8(%arg0: i32) -> (i32, i32) {
    %c0_i32 = arith.constant 0 : i32
    %c0_i32_0 = arith.constant 0 : i32
    %c0_i32_1 = arith.constant 0 : i32
    return %c0_i32, %c0_i32_0 : i32, i32
  }
  func.func @transform_9(%arg0: i32) -> (i32, i32, i32) {
    %c0_i32 = arith.constant 0 : i32
    %c0_i32_0 = arith.constant 0 : i32
    %c0_i32_1 = arith.constant 0 : i32
    return %arg0, %c0_i32, %c0_i32_0 : i32, i32, i32
  }
}

</mosaic_0001>

<llo_original>
// kernel: tpu_custom_call.1
$region0: #{tpu_custom_call.1}
  #allocation0 [shape = 'u32[]', space=smem, size = 0x4, offset = 0x4, fixed_abs, tag = 'smem constant byte address 0x4 - core index']
  #allocation1 [shape = 'u32[144,128]{1,0:T(1,128)}', space=vmem, size = 0x12000, scoped, tag = 'internal scratch']
  %s0 = inlined_call_operand.vmem [shape: f32[2,4,32], index: 0, kind: input, shape index: {}]
  %s1 = inlined_call_operand.vmem [shape: f32[8,20], index: 1, kind: input, shape index: {}]
  %s2 = inlined_call_operand.vmem [shape: f32[8,3], index: 2, kind: input, shape index: {}]
  %s3 = inlined_call_operand.vmem [shape: f32[16,24], index: 3, kind: input, shape index: {}]
  %s4 = inlined_call_operand.vmem [shape: f32[16,3], index: 4, kind: input, shape index: {}]
  %s5 = inlined_call_operand.vmem [shape: f32[16,48], index: 5, kind: input, shape index: {}]
  %s6 = inlined_call_operand.vmem [shape: f32[16,1], index: 6, kind: input, shape index: {}]
  %s7 = inlined_call_operand.vmem [shape: f32[5,16], index: 7, kind: input, shape index: {}]
  %s8 = inlined_call_operand.vmem [shape: f32[5,1], index: 8, kind: input, shape index: {}]
  %s9 = inlined_call_operand.hbm [shape: f32[2,8,128], index: 9, kind: output, shape index: {}]
  %s10 = sld [smem:[#allocation0]]
  $region69: #{tpu_custom_call.1} parent=0
    _
  %s12 = ssub.s32 1, %s10
  %s13 = scalar_select 0, %s12, %s10
  $region1: #{tpu_custom_call.1} parent=0
    #allocation2 [shape = 'u8[8192]{0}', space=vmem, size = 0x2000, scoped, tag = 'output window, operand 0']
    #allocation3 [shape = 's32[2]{0}', space=sflag, size = 0x8, scoped, tag = 'scoped memory for tpu_custom_call.1']
    %14 = vsyncpa [#allocation3], 0
    %s15 = scalar_lea.sflag [#allocation3], 1
    %16 = vsyncpa %s15, 0
    loop: start=0, step=1, limit=4
    $region2: #{tpu_custom_call.1} parent=1 // loop_pre_header
      _
    $region3: #{tpu_custom_call.1} parent=1 // loop_header
      %s18 = sphi 0, %s22
      %p19 = scmp.ge.s32.totalorder %s18, 4
      %s28 = sphi 0, %s30
      %s31 = sphi 0, %s28
      %s32 = sphi 0, %s31
      %s48 = sphi 0, %s32
      %s52 = sphi 0, %s52
      %s54 = sphi 0, %s52
      %s55 = sphi 0, %s54
      %s69 = sphi 0, %s55
      %s73 = sphi 0, %s73
      %s75 = sphi 0, %s73
      %s76 = sphi 0, %s75
      %s90 = sphi 0, %s76
      %s94 = sphi 0, %s94
      %s96 = sphi 0, %s94
      %s97 = sphi 0, %s96
      %s111 = sphi 0, %s97
      %s115 = sphi 0, %s115
      %s117 = sphi 0, %s115
      %s118 = sphi 0, %s117
      %s132 = sphi 0, %s118
      %s136 = sphi 0, %s136
      %s138 = sphi 0, %s136
      %s139 = sphi 0, %s138
      %s153 = sphi 0, %s139
      %s157 = sphi 0, %s157
      %s159 = sphi 0, %s157
      %s160 = sphi 0, %s159
      %s174 = sphi 0, %s160
      %s178 = sphi 0, %s178
      %s180 = sphi 0, %s178
      %s181 = sphi 0, %s180
      %s195 = sphi 0, %s181
      %s199 = sphi 0, %s199
      %s201 = sphi 0, %s199
      %s202 = sphi 0, %s201
      %s216 = sphi 0, %s202
      %s222 = sphi 0, %s224
      %s225 = sphi 0, %s222
      %s226 = sphi 0, %s225
      %s242 = sphi 0, %s226
    $region4: #{tpu_custom_call.1} parent=1 // loop_header_branch
      %21 = sbr.rel (%p19) target = $region8
    $region5: #{tpu_custom_call.1} parent=1 // loop_body
      %s23 = ssub.s32 %s18, 1
      %s24 = ssub.s32 %s18, 2
      %s25 = sadd.s32 %s18, 1
      %s26 = ssub.s32 %s18, %s25
      %p27 = scmp.eq.s32.totalorder %s26, 0
      %s29 = sadd.s32 %s28, 1
      %s30 = scalar_select %p27, %s28, %s29
      %p33 = pneg %p27
      %p34 = scmp.eq.s32.totalorder %s18, 1
      %p35 = por %p33, %p34
      %p36 = scmp.ne.s32.totalorder %s28, %s31
      %p37 = scmp.eq.s32.totalorder %s18, 0
      %p38 = por %p36, %p37
      %p39 = scmp.ne.s32.totalorder %s28, %s31
      %p40 = scmp.eq.s32.totalorder %s23, 1
      %p41 = por %p39, %p40
      %p42 = scmp.ne.s32.totalorder %s31, %s32
      %p43 = scmp.eq.s32.totalorder %s23, 0
      %p44 = por %p42, %p43
      %p45 = scmp.ne.s32.totalorder %s31, %s32
      %p46 = scmp.eq.s32.totalorder %s24, 1
      %p47 = por %p45, %p46
      %p49 = scmp.ne.s32.totalorder %s32, %s48
      %p50 = scmp.eq.s32.totalorder %s24, 0
      %p51 = por %p49, %p50
      %s53 = sadd.s32 %s52, 1
      %p56 = scmp.eq.s32.totalorder %s18, 1
      %p57 = scmp.ne.s32.totalorder %s52, %s54
      %p58 = scmp.eq.s32.totalorder %s18, 0
      %p59 = por %p57, %p58
      %p60 = scmp.ne.s32.totalorder %s52, %s54
      %p61 = scmp.eq.s32.totalorder %s23, 1
      %p62 = por %p60, %p61
      %p63 = scmp.ne.s32.totalorder %s54, %s55
      %p64 = scmp.eq.s32.totalorder %s23, 0
      %p65 = por %p63, %p64
      %p66 = scmp.ne.s32.totalorder %s54, %s55
      %p67 = scmp.eq.s32.totalorder %s24, 1
      %p68 = por %p66, %p67
      %p70 = scmp.ne.s32.totalorder %s55, %s69
      %p71 = scmp.eq.s32.totalorder %s24, 0
      %p72 = por %p70, %p71
      %s74 = sadd.s32 %s73, 1
      %p77 = scmp.eq.s32.totalorder %s18, 1
      %p78 = scmp.ne.s32.totalorder %s73, %s75
      %p79 = scmp.eq.s32.totalorder %s18, 0
      %p80 = por %p78, %p79
      %p81 = scmp.ne.s32.totalorder %s73, %s75
      %p82 = scmp.eq.s32.totalorder %s23, 1
      %p83 = por %p81, %p82
      %p84 = scmp.ne.s32.totalorder %s75, %s76
      %p85 = scmp.eq.s32.totalorder %s23, 0
      %p86 = por %p84, %p85
      %p87 = scmp.ne.s32.totalorder %s75, %s76
      %p88 = scmp.eq.s32.totalorder %s24, 1
      %p89 = por %p87, %p88
      %p91 = scmp.ne.s32.totalorder %s76, %s90
      %p92 = scmp.eq.s32.totalorder %s24, 0
      %p93 = por %p91, %p92
      %s95 = sadd.s32 %s94, 1
      %p98 = scmp.eq.s32.totalorder %s18, 1
      %p99 = scmp.ne.s32.totalorder %s94, %s96
      %p100 = scmp.eq.s32.totalorder %s18, 0
      %p101 = por %p99, %p100
      %p102 = scmp.ne.s32.totalorder %s94, %s96
      %p103 = scmp.eq.s32.totalorder %s23, 1
      %p104 = por %p102, %p103
      %p105 = scmp.ne.s32.totalorder %s96, %s97
      %p106 = scmp.eq.s32.totalorder %s23, 0
      %p107 = por %p105, %p106
      %p108 = scmp.ne.s32.totalorder %s96, %s97
      %p109 = scmp.eq.s32.totalorder %s24, 1
      %p110 = por %p108, %p109
      %p112 = scmp.ne.s32.totalorder %s97, %s111
      %p113 = scmp.eq.s32.totalorder %s24, 0
      %p114 = por %p112, %p113
      %s116 = sadd.s32 %s115, 1
      %p119 = scmp.eq.s32.totalorder %s18, 1
      %p120 = scmp.ne.s32.totalorder %s115, %s117
      %p121 = scmp.eq.s32.totalorder %s18, 0
      %p122 = por %p120, %p121
      %p123 = scmp.ne.s32.totalorder %s115, %s117
      %p124 = scmp.eq.s32.totalorder %s23, 1
      %p125 = por %p123, %p124
      %p126 = scmp.ne.s32.totalorder %s117, %s118
      %p127 = scmp.eq.s32.totalorder %s23, 0
      %p128 = por %p126, %p127
      %p129 = scmp.ne.s32.totalorder %s117, %s118
      %p130 = scmp.eq.s32.totalorder %s24, 1
      %p131 = por %p129, %p130
      %p133 = scmp.ne.s32.totalorder %s118, %s132
      %p134 = scmp.eq.s32.totalorder %s24, 0
      %p135 = por %p133, %p134
      %s137 = sadd.s32 %s136, 1
      %p140 = scmp.eq.s32.totalorder %s18, 1
      %p141 = scmp.ne.s32.totalorder %s136, %s138
      %p142 = scmp.eq.s32.totalorder %s18, 0
      %p143 = por %p141, %p142
      %p144 = scmp.ne.s32.totalorder %s136, %s138
      %p145 = scmp.eq.s32.totalorder %s23, 1
      %p146 = por %p144, %p145
      %p147 = scmp.ne.s32.totalorder %s138, %s139
      %p148 = scmp.eq.s32.totalorder %s23, 0
      %p149 = por %p147, %p148
      %p150 = scmp.ne.s32.totalorder %s138, %s139
      %p151 = scmp.eq.s32.totalorder %s24, 1
      %p152 = por %p150, %p151
      %p154 = scmp.ne.s32.totalorder %s139, %s153
      %p155 = scmp.eq.s32.totalorder %s24, 0
      %p156 = por %p154, %p155
      %s158 = sadd.s32 %s157, 1
      %p161 = scmp.eq.s32.totalorder %s18, 1
      %p162 = scmp.ne.s32.totalorder %s157, %s159
      %p163 = scmp.eq.s32.totalorder %s18, 0
      %p164 = por %p162, %p163
      %p165 = scmp.ne.s32.totalorder %s157, %s159
      %p166 = scmp.eq.s32.totalorder %s23, 1
      %p167 = por %p165, %p166
      %p168 = scmp.ne.s32.totalorder %s159, %s160
      %p169 = scmp.eq.s32.totalorder %s23, 0
      %p170 = por %p168, %p169
      %p171 = scmp.ne.s32.totalorder %s159, %s160
      %p172 = scmp.eq.s32.totalorder %s24, 1
      %p173 = por %p171, %p172
      %p175 = scmp.ne.s32.totalorder %s160, %s174
      %p176 = scmp.eq.s32.totalorder %s24, 0
      %p177 = por %p175, %p176
      %s179 = sadd.s32 %s178, 1
      %p182 = scmp.eq.s32.totalorder %s18, 1
      %p183 = scmp.ne.s32.totalorder %s178, %s180
      %p184 = scmp.eq.s32.totalorder %s18, 0
      %p185 = por %p183, %p184
      %p186 = scmp.ne.s32.totalorder %s178, %s180
      %p187 = scmp.eq.s32.totalorder %s23, 1
      %p188 = por %p186, %p187
      %p189 = scmp.ne.s32.totalorder %s180, %s181
      %p190 = scmp.eq.s32.totalorder %s23, 0
      %p191 = por %p189, %p190
      %p192 = scmp.ne.s32.totalorder %s180, %s181
      %p193 = scmp.eq.s32.totalorder %s24, 1
      %p194 = por %p192, %p193
      %p196 = scmp.ne.s32.totalorder %s181, %s195
      %p197 = scmp.eq.s32.totalorder %s24, 0
      %p198 = por %p196, %p197
      %s200 = sadd.s32 %s199, 1
      %p203 = scmp.eq.s32.totalorder %s18, 1
      %p204 = scmp.ne.s32.totalorder %s199, %s201
      %p205 = scmp.eq.s32.totalorder %s18, 0
      %p206 = por %p204, %p205
      %p207 = scmp.ne.s32.totalorder %s199, %s201
      %p208 = scmp.eq.s32.totalorder %s23, 1
      %p209 = por %p207, %p208
      %p210 = scmp.ne.s32.totalorder %s201, %s202
      %p211 = scmp.eq.s32.totalorder %s23, 0
      %p212 = por %p210, %p211
      %p213 = scmp.ne.s32.totalorder %s201, %s202
      %p214 = scmp.eq.s32.totalorder %s24, 1
      %p215 = por %p213, %p214
      %p217 = scmp.ne.s32.totalorder %s202, %s216
      %p218 = scmp.eq.s32.totalorder %s24, 0
      %p219 = por %p217, %p218
      %s220 = ssub.s32 %s18, %s25
      %p221 = scmp.eq.s32.totalorder %s220, 0
      %s223 = sadd.s32 %s222, 1
      %s224 = scalar_select %p221, %s222, %s223
      %p227 = pneg %p221
      %p228 = scmp.eq.s32.totalorder %s18, 1
      %p229 = por %p227, %p228
      %p230 = scmp.ne.s32.totalorder %s222, %s225
      %p231 = scmp.eq.s32.totalorder %s18, 0
      %p232 = por %p230, %p231
      %p233 = scmp.ne.s32.totalorder %s222, %s225
      %p234 = scmp.eq.s32.totalorder %s23, 1
      %p235 = por %p233, %p234
      %p236 = scmp.ne.s32.totalorder %s225, %s226
      %p237 = scmp.eq.s32.totalorder %s23, 0
      %p238 = por %p236, %p237
      %p239 = scmp.ne.s32.totalorder %s225, %s226
      %p240 = scmp.eq.s32.totalorder %s24, 1
      %p241 = por %p239, %p240
      %p243 = scmp.ne.s32.totalorder %s226, %s242
      %p244 = scmp.eq.s32.totalorder %s24, 0
      %p245 = por %p243, %p244
      %p246 = scmp.le.s32.totalorder 1, %s18
      %p247 = scmp.lt.s32.totalorder %s18, 3
      %p248 = pnand %p246, %p247
      %p249 = pneg %p248
      // Predicated region
      $region9: #{tpu_custom_call.1} parent=5 // pred_check
        _
      $region10: #{tpu_custom_call.1} parent=5 // pred_check_branch
        %251 = sbr.rel (%p248) target = $region12
      $region11: #{tpu_custom_call.1} parent=5 // pred_region
        %s252 = ssub.s32 %s18, 1
        // Predicated region
        $region13: #{tpu_custom_call.1} parent=11 // pred_check
          %p253 = pneg %p65
        $region14: #{tpu_custom_call.1} parent=11 // pred_check_branch
          %255 = sbr.rel (%p253) target = $region16
        $region15: #{tpu_custom_call.1} parent=11 // pred_region
          _
        $region16: #{tpu_custom_call.1} parent=11 // pred_fallthru
          _
        // Predicated region
        $region17: #{tpu_custom_call.1} parent=11 // pred_check
          %p256 = pneg %p86
        $region18: #{tpu_custom_call.1} parent=11 // pred_check_branch
          %258 = sbr.rel (%p256) target = $region20
        $region19: #{tpu_custom_call.1} parent=11 // pred_region
          _
        $region20: #{tpu_custom_call.1} parent=11 // pred_fallthru
          _
        // Predicated region
        $region21: #{tpu_custom_call.1} parent=11 // pred_check
          %p259 = pneg %p107
        $region22: #{tpu_custom_call.1} parent=11 // pred_check_branch
          %261 = sbr.rel (%p259) target = $region24
        $region23: #{tpu_custom_call.1} parent=11 // pred_region
          _
        $region24: #{tpu_custom_call.1} parent=11 // pred_fallthru
          _
        // Predicated region
        $region25: #{tpu_custom_call.1} parent=11 // pred_check
          %p262 = pneg %p128
        $region26: #{tpu_custom_call.1} parent=11 // pred_check_branch
          %264 = sbr.rel (%p262) target = $region28
        $region27: #{tpu_custom_call.1} parent=11 // pred_region
          _
        $region28: #{tpu_custom_call.1} parent=11 // pred_fallthru
          _
        // Predicated region
        $region29: #{tpu_custom_call.1} parent=11 // pred_check
          %p265 = pneg %p149
        $region30: #{tpu_custom_call.1} parent=11 // pred_check_branch
          %267 = sbr.rel (%p265) target = $region32
        $region31: #{tpu_custom_call.1} parent=11 // pred_region
          _
        $region32: #{tpu_custom_call.1} parent=11 // pred_fallthru
          _
        // Predicated region
        $region33: #{tpu_custom_call.1} parent=11 // pred_check
          %p268 = pneg %p170
        $region34: #{tpu_custom_call.1} parent=11 // pred_check_branch
          %270 = sbr.rel (%p268) target = $region36
        $region35: #{tpu_custom_call.1} parent=11 // pred_region
          _
        $region36: #{tpu_custom_call.1} parent=11 // pred_fallthru
          _
        // Predicated region
        $region37: #{tpu_custom_call.1} parent=11 // pred_check
          %p271 = pneg %p191
        $region38: #{tpu_custom_call.1} parent=11 // pred_check_branch
          %273 = sbr.rel (%p271) target = $region40
        $region39: #{tpu_custom_call.1} parent=11 // pred_region
          _
        $region40: #{tpu_custom_call.1} parent=11 // pred_fallthru
          _
        // Predicated region
        $region41: #{tpu_custom_call.1} parent=11 // pred_check
          %p274 = pneg %p212
        $region42: #{tpu_custom_call.1} parent=11 // pred_check_branch
          %276 = sbr.rel (%p274) target = $region44
        $region43: #{tpu_custom_call.1} parent=11 // pred_region
          _
        $region44: #{tpu_custom_call.1} parent=11 // pred_fallthru
          _
      $region12: #{tpu_custom_call.1} parent=5 // pred_fallthru
        _
      %p277 = scmp.lt.s32.totalorder %s18, 2
      // Predicated region
      $region45: #{tpu_custom_call.1} parent=5 // pred_check
        %p278 = pneg %p277
      $region46: #{tpu_custom_call.1} parent=5 // pred_check_branch
        %280 = sbr.rel (%p278) target = $region48
      $region47: #{tpu_custom_call.1} parent=5 // pred_region
        // Predicated region
        $region49: #{tpu_custom_call.1} parent=47 // pred_check
          %p281 = pneg %p38
        $region50: #{tpu_custom_call.1} parent=47 // pred_check_branch
          %283 = sbr.rel (%p281) target = $region52
        $region51: #{tpu_custom_call.1} parent=47 // pred_region
          %p284 = scmp.lt.s32.totalorder %s18, 1
          %s285 = scalar_select %p284, %s18, 1
          %s286 = smul.addr %s285, 4
          %s287 = scalar_lea.vmem %s0, %s286
        $region52: #{tpu_custom_call.1} parent=47 // pred_fallthru
          _
      $region48: #{tpu_custom_call.1} parent=5 // pred_fallthru
        _
      %p288 = scmp.le.s32.totalorder 1, %s18
      %p289 = scmp.lt.s32.totalorder %s18, 3
      %p290 = pnand %p288, %p289
      %p291 = pneg %p290
      // Predicated region
      $region53: #{tpu_custom_call.1} parent=5 // pred_check
        _
      $region54: #{tpu_custom_call.1} parent=5 // pred_check_branch
        %293 = sbr.rel (%p290) target = $region56
      $region55: #{tpu_custom_call.1} parent=5 // pred_region
        %s294 = ssub.s32 %s18, 1
        %p295 = scmp.lt.s32.totalorder %s23, 1
        %s296 = scalar_select %p295, %s23, 1
        %s297 = smul.addr %s296, 4
        %s298 = scalar_lea.vmem %s0, %s297
        %p299 = pneg %p44
        %p300 = pneg %p41
        %p301 = pneg %p65
        %p302 = pneg %p62
        %p303 = pneg %p86
        %p304 = pneg %p83
        %p305 = pneg %p107
        %p306 = pneg %p104
        %p307 = pneg %p128
        %p308 = pneg %p125
        %p309 = pneg %p149
        %p310 = pneg %p146
        %p311 = pneg %p170
        %p312 = pneg %p167
        %p313 = pneg %p191
        %p314 = pneg %p188
        %p315 = pneg %p212
        %p316 = pneg %p209
        %p317 = pneg %p238
        %p318 = pneg %p235
        %s319 = sand.u32 %s225, 1
        %s320 = scalar_lea.sflag [#allocation3], %s319
        %s321 = sand.u32 %s225, 1
        %s322 = smul.addr %s321, 8
        %s323 = scalar_lea.vmem [#allocation2], %s322
        %p324 = scmp.lt.s32.totalorder %s23, 1
        %s325 = scalar_select %p324, %s23, 1
        %s326 = smul.addr %s325, 4
        %s327 = scalar_lea.vmem %s0, %s326
        %v328 = vld [vmem:[%s327] sm:$0xf]
        %v329 = vld [vmem:[%s1] sm:$0xff]
        %v330 = vld [vmem:[%s2] sm:$0xff]
        %v332 = vrot.slane %v328, 4
        %333 = vrot.lane.b32.xlu0 %v332, 127
        %v334 = vpop.permute.xlu0 %333
        %336 = vrot.lane.b32.xlu0 %v328, 126
        %v337 = vpop.permute.xlu0 %336
        %339 = vrot.lane.b32.xlu0 %v332, 125
        %v340 = vpop.permute.xlu0 %339
        %342 = vrot.lane.b32.xlu0 %v328, 124
        %v343 = vpop.permute.xlu0 %342
        %vm344 = vcmask 1043456
        %v345 = vsel %vm344, %v328, %v334
        %v346 = vsel %vm344, %v337, %v340
        %348 = vset.pattern.permute.xlu0 0
        %349 = vperm.xlu0 %348, %v330
        %v350 = vpop.permute.xlu0 %349
        %vm352 = vcmask 162816
        %v354 = vsel %vm352, %v329, 0
        %v356 = vsel %vm344, %v343, 0
        %358 = vmatprep.subr.mxu0 0.0
        %359 = vmatpush1.msra.mxu0 0.0
        %360 = vmatprep.subr.mxu0 0.0
        %361 = vmatpush1.msra.mxu0 0.0
        %362 = vmatprep.subr.mxu0 0.0
        %363 = vmatpush1.msra.mxu0 0.0
        %364 = vmatprep.subr.mxu0 0.0
        %365 = vmatpush1.msra.mxu0 0.0
        %366 = vmatprep.subr.mxu0 0.0
        %367 = vmatpush1.msra.mxu0 0.0
        %368 = vmatprep.subr.mxu0 0.0
        %369 = vmatpush1.msra.mxu0 0.0
        %370 = vmatprep.subr.mxu0 0.0
        %371 = vmatpush1.msra.mxu0 0.0
        %372 = vmatprep.subr.mxu0 0.0
        %373 = vmatpush1.msra.mxu0 0.0
        %374 = vmatprep.subr.mxu0 0.0
        %375 = vmatpush1.msra.mxu0 0.0
        %376 = vmatprep.subr.mxu0 0.0
        %377 = vmatpush1.msra.mxu0 0.0
        %378 = vmatprep.subr.mxu0 0.0
        %379 = vmatpush1.msra.mxu0 0.0
        %380 = vmatprep.subr.mxu0 0.0
        %381 = vmatpush1.msra.mxu0 0.0
        %382 = vmatprep.subr.mxu0 0.0
        %383 = vmatpush1.msra.mxu0 0.0
        %384 = vmatprep.subr.mxu0 0.0
        %385 = vmatpush1.msra.mxu0 %v356
        %386 = vmatprep.subr.mxu0 0.0
        %387 = vmatpush1.msra.mxu0 %v346
        %388 = vmatprep.subr.mxu0 0.0
        %389 = vmatpush1.msra.mxu0 %v345
        %390 = vmatprep.subr.mxu0 0.0
        %391 = vmatpush2.msra.mxu0 0.0
        %392 = vmatprep.subr.mxu0 0.0
        %393 = vmatpush2.msra.mxu0 0.0
        %394 = vmatprep.subr.mxu0 0.0
        %395 = vmatpush2.msra.mxu0 0.0
        %396 = vmatprep.subr.mxu0 0.0
        %397 = vmatpush2.msra.mxu0 0.0
        %398 = vmatprep.subr.mxu0 0.0
        %399 = vmatpush2.msra.mxu0 0.0
        %400 = vmatprep.subr.mxu0 0.0
        %401 = vmatpush2.msra.mxu0 0.0
        %402 = vmatprep.subr.mxu0 0.0
        %403 = vmatpush2.msra.mxu0 0.0
        %404 = vmatprep.subr.mxu0 0.0
        %405 = vmatpush2.msra.mxu0 0.0
        %406 = vmatprep.subr.mxu0 0.0
        %407 = vmatpush2.msra.mxu0 0.0
        %408 = vmatprep.subr.mxu0 0.0
        %409 = vmatpush2.msra.mxu0 0.0
        %410 = vmatprep.subr.mxu0 0.0
        %411 = vmatpush2.msra.mxu0 0.0
        %412 = vmatprep.subr.mxu0 0.0
        %413 = vmatpush2.msra.mxu0 0.0
        %414 = vmatprep.subr.mxu0 0.0
        %415 = vmatpush2.msra.mxu0 0.0
        %416 = vmatprep.subr.mxu0 0.0
        %417 = vmatpush2.msra.mxu0 0.0
        %418 = vmatprep.subr.mxu0 0.0
        %419 = vmatpush2.msra.mxu0 0.0
        %420 = vmatprep.subr.mxu0 0.0
        %421 = vmatpush2.msra.mxu0 0.0
        %422 = vmatprep.mubr.f32.mxu0 0.0
        %423 = vmatmul.mubr.f32.gmra.mxu0 %v354
        %v424 = vpop.f32.mrf.mxu0
        %v425 = vadd.f32 %v350, %v424
        %v426 = vpop.f32.mrf.mxu0
        %427 = vdwg.mxu0
        %vm428 = vcmp.ge.f32.partialorder %v425, 0.0
        %v429 = vmul.f32 %v425, 0.01
        %v430 = vsel %vm428, %v425, %v429
        %vm431 = vcmask 228352
        %v432 = vsel %vm431, %v430, 0.0
        %v433 = vrot.slane %v432, 4
        %v434 = vadd.f32 %v432, %v433
        %v435 = vrot.slane %v434, 2
        %v436 = vadd.f32 %v434, %v435
        %v437 = vrot.slane %v436, 1
        %v438 = vadd.f32 %v436, %v437
        %v439 = vrcp.pop 8.0
        %v440 = vmul.f32 %v438, %v439
        %v441 = vsub.f32 %v430, %v440
        %v442 = vmul.f32 %v441, %v441
        %v443 = vsel %vm431, %v442, 0.0
        %v444 = vrot.slane %v443, 4
        %v445 = vadd.f32 %v443, %v444
        %v446 = vrot.slane %v445, 2
        %v447 = vadd.f32 %v445, %v446
        %v448 = vrot.slane %v447, 1
        %v449 = vadd.f32 %v447, %v448
        %v450 = vmul.f32 %v449, %v439
        %v451 = vadd.f32 %v450, 1e-05
        %v452 = vrsqrt.pop %v451
        %v453 = vmul.f32 %v441, %v452
        %454 = vset.pattern.permute.xlu0 1
        %455 = vperm.xlu0 %454, %v330
        %v456 = vpop.permute.xlu0 %455
        %v458 = vmul.f32 %v453, %v456
        %459 = vset.pattern.permute.xlu0 2
        %460 = vperm.xlu0 %459, %v330
        %v461 = vpop.permute.xlu0 %460
        %v463 = vadd.f32 %v458, %v461
        %v464 = vld [vmem:[%s3] sm:$0xff]
        %v465 = vld [vmem:[%s3 + $0x8] sm:$0xff]
        %v466 = vld [vmem:[%s4] sm:$0xff]
        %v467 = vld [vmem:[%s4 + $0x8] sm:$0xff]
        %469 = vrot.lane.b32.xlu0 %v463, 126
        %v470 = vpop.permute.xlu0 %469
        %472 = vrot.lane.b32.xlu0 %v463, 124
        %v473 = vpop.permute.xlu0 %472
        %476 = vset.pattern.permute.xlu0 0
        %477 = vperm.xlu0 %476, %v466
        %v478 = vpop.permute.xlu0 %477
        %481 = vset.pattern.permute.xlu0 0
        %482 = vperm.xlu0 %481, %v467
        %v483 = vpop.permute.xlu0 %482
        %vm485 = vcmask 195584
        %v487 = vsel %vm485, %v464, 0
        %v490 = vsel %vm485, %v465, 0
        %492 = vmatprep.subr.mxu0 0.0
        %493 = vmatpush1.msra.mxu0 0.0
        %494 = vmatprep.subr.mxu0 0.0
        %495 = vmatpush1.msra.mxu0 0.0
        %496 = vmatprep.subr.mxu0 0.0
        %497 = vmatpush1.msra.mxu0 0.0
        %498 = vmatprep.subr.mxu0 0.0
        %499 = vmatpush1.msra.mxu0 0.0
        %500 = vmatprep.subr.mxu0 0.0
        %501 = vmatpush1.msra.mxu0 0.0
        %502 = vmatprep.subr.mxu0 0.0
        %503 = vmatpush1.msra.mxu0 0.0
        %504 = vmatprep.subr.mxu0 0.0
        %505 = vmatpush1.msra.mxu0 0.0
        %506 = vmatprep.subr.mxu0 0.0
        %507 = vmatpush1.msra.mxu0 0.0
        %508 = vmatprep.subr.mxu0 0.0
        %509 = vmatpush1.msra.mxu0 0.0
        %510 = vmatprep.subr.mxu0 0.0
        %511 = vmatpush1.msra.mxu0 0.0
        %512 = vmatprep.subr.mxu0 0.0
        %513 = vmatpush1.msra.mxu0 0.0
        %514 = vmatprep.subr.mxu0 0.0
        %515 = vmatpush1.msra.mxu0 0.0
        %516 = vmatprep.subr.mxu0 0.0
        %517 = vmatpush1.msra.mxu0 0.0
        %518 = vmatprep.subr.mxu0 0.0
        %519 = vmatpush1.msra.mxu0 %v473
        %520 = vmatprep.subr.mxu0 0.0
        %521 = vmatpush1.msra.mxu0 %v470
        %522 = vmatprep.subr.mxu0 0.0
        %523 = vmatpush1.msra.mxu0 %v463
        %524 = vmatprep.subr.mxu0 0.0
        %525 = vmatpush2.msra.mxu0 0.0
        %526 = vmatprep.subr.mxu0 0.0
        %527 = vmatpush2.msra.mxu0 0.0
        %528 = vmatprep.subr.mxu0 0.0
        %529 = vmatpush2.msra.mxu0 0.0
        %530 = vmatprep.subr.mxu0 0.0
        %531 = vmatpush2.msra.mxu0 0.0
        %532 = vmatprep.subr.mxu0 0.0
        %533 = vmatpush2.msra.mxu0 0.0
        %534 = vmatprep.subr.mxu0 0.0
        %535 = vmatpush2.msra.mxu0 0.0
        %536 = vmatprep.subr.mxu0 0.0
        %537 = vmatpush2.msra.mxu0 0.0
        %538 = vmatprep.subr.mxu0 0.0
        %539 = vmatpush2.msra.mxu0 0.0
        %540 = vmatprep.subr.mxu0 0.0
        %541 = vmatpush2.msra.mxu0 0.0
        %542 = vmatprep.subr.mxu0 0.0
        %543 = vmatpush2.msra.mxu0 0.0
        %544 = vmatprep.subr.mxu0 0.0
        %545 = vmatpush2.msra.mxu0 0.0
        %546 = vmatprep.subr.mxu0 0.0
        %547 = vmatpush2.msra.mxu0 0.0
        %548 = vmatprep.subr.mxu0 0.0
        %549 = vmatpush2.msra.mxu0 0.0
        %550 = vmatprep.subr.mxu0 0.0
        %551 = vmatpush2.msra.mxu0 0.0
        %552 = vmatprep.subr.mxu0 0.0
        %553 = vmatpush2.msra.mxu0 0.0
        %554 = vmatprep.subr.mxu0 0.0
        %555 = vmatpush2.msra.mxu0 0.0
        %556 = vmatprep.mubr.f32.mxu0 0.0
        %557 = vmatmul.mubr.f32.gmra.mxu0 %v487
        %v558 = vpop.f32.mrf.mxu0
        %v559 = vadd.f32 %v478, %v558
        %v560 = vpop.f32.mrf.mxu0
        %561 = vmatprep.mubr.f32.mxu0 0.0
        %562 = vmatmul.mubr.f32.gmra.mxu0 %v490
        %v563 = vpop.f32.mrf.mxu0
        %v564 = vadd.f32 %v483, %v563
        %v565 = vpop.f32.mrf.mxu0
        %566 = vdwg.mxu0
        %vm567 = vcmp.ge.f32.partialorder %v559, 0.0
        %vm568 = vcmp.ge.f32.partialorder %v564, 0.0
        %v569 = vmul.f32 %v559, 0.01
        %v570 = vmul.f32 %v564, 0.01
        %v571 = vsel %vm567, %v559, %v569
        %v572 = vsel %vm568, %v564, %v570
        %v573 = vsel %vm485, %v571, 0.0
        %v574 = vsel %vm485, %v572, 0.0
        %v575 = vadd.f32 %v573, %v574
        %v576 = vrot.slane %v575, 4
        %v577 = vadd.f32 %v575, %v576
        %v578 = vrot.slane %v577, 2
        %v579 = vadd.f32 %v577, %v578
        %v580 = vrot.slane %v579, 1
        %v581 = vadd.f32 %v579, %v580
        %v582 = vrcp.pop 16.0
        %v583 = vmul.f32 %v581, %v582
        %v584 = vsub.f32 %v571, %v583
        %v585 = vsub.f32 %v572, %v583
        %v586 = vmul.f32 %v584, %v584
        %v587 = vmul.f32 %v585, %v585
        %v588 = vsel %vm485, %v586, 0.0
        %v589 = vsel %vm485, %v587, 0.0
        %v590 = vadd.f32 %v588, %v589
        %v591 = vrot.slane %v590, 4
        %v592 = vadd.f32 %v590, %v591
        %v593 = vrot.slane %v592, 2
        %v594 = vadd.f32 %v592, %v593
        %v595 = vrot.slane %v594, 1
        %v596 = vadd.f32 %v594, %v595
        %v597 = vmul.f32 %v596, %v582
        %v598 = vadd.f32 %v597, 1e-05
        %v599 = vrsqrt.pop %v598
        %v600 = vmul.f32 %v584, %v599
        %v601 = vmul.f32 %v585, %v599
        %602 = vset.pattern.permute.xlu0 1
        %603 = vperm.xlu0 %602, %v466
        %v604 = vpop.permute.xlu0 %603
        %606 = vset.pattern.permute.xlu0 1
        %607 = vperm.xlu0 %606, %v467
        %v608 = vpop.permute.xlu0 %607
        %v610 = vmul.f32 %v600, %v604
        %v611 = vmul.f32 %v601, %v608
        %612 = vset.pattern.permute.xlu0 2
        %613 = vperm.xlu0 %612, %v466
        %v614 = vpop.permute.xlu0 %613
        %616 = vset.pattern.permute.xlu0 2
        %617 = vperm.xlu0 %616, %v467
        %v618 = vpop.permute.xlu0 %617
        %v620 = vadd.f32 %v610, %v614
        %v621 = vadd.f32 %v611, %v618
        %v622 = vld [vmem:[%s5] sm:$0xff]
        %v623 = vld [vmem:[%s5 + $0x8] sm:$0xff]
        %v624 = vld [vmem:[%s6] sm:$0xff]
        %v625 = vld [vmem:[%s6 + $0x8] sm:$0xff]
        %v626 = vld [vmem:[%s7] sm:$0x1f]
        %v627 = vld [vmem:[%s8] sm:$0x1f]
        %630 = vrot.lane.b32.xlu0 %v620, 1
        %v631 = vpop.permute.xlu0 %630
        %632 = vrot.lane.b32.xlu0 %v621, 1
        %v633 = vpop.permute.xlu0 %632
        %636 = vrot.lane.b32.xlu0 %v620, 2
        %v637 = vpop.permute.xlu0 %636
        %638 = vrot.lane.b32.xlu0 %v621, 2
        %v639 = vpop.permute.xlu0 %638
        %vm642 = vcmask 7168
        %v643 = vsel %vm642, %v620, %v631
        %v644 = vsel %vm642, %v621, %v633
        %vm645 = vcmask 203776
        %v646 = vsel %vm645, %v643, %v637
        %v647 = vsel %vm645, %v644, %v639
        %650 = vrot.lane.b32.xlu0 %v646, 127
        %v651 = vpop.permute.xlu0 %650
        %652 = vrot.lane.b32.xlu0 %v647, 127
        %v653 = vpop.permute.xlu0 %652
        %656 = vrot.lane.b32.xlu0 %v646, 126
        %v657 = vpop.permute.xlu0 %656
        %658 = vrot.lane.b32.xlu0 %v647, 126
        %v659 = vpop.permute.xlu0 %658
        %663 = vset.pattern.permute.xlu0 0
        %664 = vperm.xlu0 %663, %v624
        %v665 = vpop.permute.xlu0 %664
        %668 = vset.pattern.permute.xlu0 0
        %669 = vperm.xlu0 %668, %v625
        %v670 = vpop.permute.xlu0 %669
        %vm672 = vcmask 392192
        %v674 = vsel %vm672, %v622, 0
        %v677 = vsel %vm672, %v623, 0
        %679 = vmatprep.subr.mxu0 0.0
        %680 = vmatpush1.msra.mxu0 0.0
        %681 = vmatprep.subr.mxu0 0.0
        %682 = vmatpush1.msra.mxu0 0.0
        %683 = vmatprep.subr.mxu0 0.0
        %684 = vmatpush1.msra.mxu0 0.0
        %685 = vmatprep.subr.mxu0 0.0
        %686 = vmatpush1.msra.mxu0 0.0
        %687 = vmatprep.subr.mxu0 0.0
        %688 = vmatpush1.msra.mxu0 0.0
        %689 = vmatprep.subr.mxu0 0.0
        %690 = vmatpush1.msra.mxu0 0.0
        %691 = vmatprep.subr.mxu0 0.0
        %692 = vmatpush1.msra.mxu0 0.0
        %693 = vmatprep.subr.mxu0 0.0
        %694 = vmatpush1.msra.mxu0 0.0
        %695 = vmatprep.subr.mxu0 0.0
        %696 = vmatpush1.msra.mxu0 0.0
        %697 = vmatprep.subr.mxu0 0.0
        %698 = vmatpush1.msra.mxu0 0.0
        %699 = vmatprep.subr.mxu0 0.0
        %700 = vmatpush1.msra.mxu0 %v659
        %701 = vmatprep.subr.mxu0 0.0
        %702 = vmatpush1.msra.mxu0 %v657
        %703 = vmatprep.subr.mxu0 0.0
        %704 = vmatpush1.msra.mxu0 %v653
        %705 = vmatprep.subr.mxu0 0.0
        %706 = vmatpush1.msra.mxu0 %v651
        %707 = vmatprep.subr.mxu0 0.0
        %708 = vmatpush1.msra.mxu0 %v647
        %709 = vmatprep.subr.mxu0 0.0
        %710 = vmatpush1.msra.mxu0 %v646
        %711 = vmatprep.subr.mxu0 0.0
        %712 = vmatpush2.msra.mxu0 0.0
        %713 = vmatprep.subr.mxu0 0.0
        %714 = vmatpush2.msra.mxu0 0.0
        %715 = vmatprep.subr.mxu0 0.0
        %716 = vmatpush2.msra.mxu0 0.0
        %717 = vmatprep.subr.mxu0 0.0
        %718 = vmatpush2.msra.mxu0 0.0
        %719 = vmatprep.subr.mxu0 0.0
        %720 = vmatpush2.msra.mxu0 0.0
        %721 = vmatprep.subr.mxu0 0.0
        %722 = vmatpush2.msra.mxu0 0.0
        %723 = vmatprep.subr.mxu0 0.0
        %724 = vmatpush2.msra.mxu0 0.0
        %725 = vmatprep.subr.mxu0 0.0
        %726 = vmatpush2.msra.mxu0 0.0
        %727 = vmatprep.subr.mxu0 0.0
        %728 = vmatpush2.msra.mxu0 0.0
        %729 = vmatprep.subr.mxu0 0.0
        %730 = vmatpush2.msra.mxu0 0.0
        %731 = vmatprep.subr.mxu0 0.0
        %732 = vmatpush2.msra.mxu0 0.0
        %733 = vmatprep.subr.mxu0 0.0
        %734 = vmatpush2.msra.mxu0 0.0
        %735 = vmatprep.subr.mxu0 0.0
        %736 = vmatpush2.msra.mxu0 0.0
        %737 = vmatprep.subr.mxu0 0.0
        %738 = vmatpush2.msra.mxu0 0.0
        %739 = vmatprep.subr.mxu0 0.0
        %740 = vmatpush2.msra.mxu0 0.0
        %741 = vmatprep.subr.mxu0 0.0
        %742 = vmatpush2.msra.mxu0 0.0
        %743 = vmatprep.mubr.f32.mxu0 0.0
        %744 = vmatmul.mubr.f32.gmra.mxu0 %v674
        %v745 = vpop.f32.mrf.mxu0
        %v746 = vadd.f32 %v665, %v745
        %v747 = vpop.f32.mrf.mxu0
        %748 = vmatprep.mubr.f32.mxu0 0.0
        %749 = vmatmul.mubr.f32.gmra.mxu0 %v677
        %v750 = vpop.f32.mrf.mxu0
        %v751 = vadd.f32 %v670, %v750
        %v752 = vpop.f32.mrf.mxu0
        %753 = vdwg.mxu0
        %vm754 = vcmp.ge.f32.partialorder %v746, 0.0
        %vm755 = vcmp.ge.f32.partialorder %v751, 0.0
        %v756 = vmul.f32 %v746, 0.01
        %v757 = vmul.f32 %v751, 0.01
        %v758 = vsel %vm754, %v746, %v756
        %v759 = vsel %vm755, %v751, %v757
        %761 = vset.pattern.permute.xlu0 0
        %762 = vperm.xlu0 %761, %v627
        %v763 = vpop.permute.xlu0 %762
        %vm765 = vcmask 130048
        %v767 = vsel %vm765, %v626, 0
        %769 = vmatprep.subr.mxu0 0.0
        %770 = vmatpush1.msra.mxu0 0.0
        %771 = vmatprep.subr.mxu0 0.0
        %772 = vmatpush1.msra.mxu0 0.0
        %773 = vmatprep.subr.mxu0 0.0
        %774 = vmatpush1.msra.mxu0 0.0
        %775 = vmatprep.subr.mxu0 0.0
        %776 = vmatpush1.msra.mxu0 0.0
        %777 = vmatprep.subr.mxu0 0.0
        %778 = vmatpush1.msra.mxu0 0.0
        %779 = vmatprep.subr.mxu0 0.0
        %780 = vmatpush1.msra.mxu0 0.0
        %781 = vmatprep.subr.mxu0 0.0
        %782 = vmatpush1.msra.mxu0 0.0
        %783 = vmatprep.subr.mxu0 0.0
        %784 = vmatpush1.msra.mxu0 0.0
        %785 = vmatprep.subr.mxu0 0.0
        %786 = vmatpush1.msra.mxu0 0.0
        %787 = vmatprep.subr.mxu0 0.0
        %788 = vmatpush1.msra.mxu0 0.0
        %789 = vmatprep.subr.mxu0 0.0
        %790 = vmatpush1.msra.mxu0 0.0
        %791 = vmatprep.subr.mxu0 0.0
        %792 = vmatpush1.msra.mxu0 0.0
        %793 = vmatprep.subr.mxu0 0.0
        %794 = vmatpush1.msra.mxu0 0.0
        %795 = vmatprep.subr.mxu0 0.0
        %796 = vmatpush1.msra.mxu0 0.0
        %797 = vmatprep.subr.mxu0 0.0
        %798 = vmatpush1.msra.mxu0 %v759
        %799 = vmatprep.subr.mxu0 0.0
        %800 = vmatpush1.msra.mxu0 %v758
        %801 = vmatprep.subr.mxu0 0.0
        %802 = vmatpush2.msra.mxu0 0.0
        %803 = vmatprep.subr.mxu0 0.0
        %804 = vmatpush2.msra.mxu0 0.0
        %805 = vmatprep.subr.mxu0 0.0
        %806 = vmatpush2.msra.mxu0 0.0
        %807 = vmatprep.subr.mxu0 0.0
        %808 = vmatpush2.msra.mxu0 0.0
        %809 = vmatprep.subr.mxu0 0.0
        %810 = vmatpush2.msra.mxu0 0.0
        %811 = vmatprep.subr.mxu0 0.0
        %812 = vmatpush2.msra.mxu0 0.0
        %813 = vmatprep.subr.mxu0 0.0
        %814 = vmatpush2.msra.mxu0 0.0
        %815 = vmatprep.subr.mxu0 0.0
        %816 = vmatpush2.msra.mxu0 0.0
        %817 = vmatprep.subr.mxu0 0.0
        %818 = vmatpush2.msra.mxu0 0.0
        %819 = vmatprep.subr.mxu0 0.0
        %820 = vmatpush2.msra.mxu0 0.0
        %821 = vmatprep.subr.mxu0 0.0
        %822 = vmatpush2.msra.mxu0 0.0
        %823 = vmatprep.subr.mxu0 0.0
        %824 = vmatpush2.msra.mxu0 0.0
        %825 = vmatprep.subr.mxu0 0.0
        %826 = vmatpush2.msra.mxu0 0.0
        %827 = vmatprep.subr.mxu0 0.0
        %828 = vmatpush2.msra.mxu0 0.0
        %829 = vmatprep.subr.mxu0 0.0
        %830 = vmatpush2.msra.mxu0 0.0
        %831 = vmatprep.subr.mxu0 0.0
        %832 = vmatpush2.msra.mxu0 0.0
        %833 = vmatprep.mubr.f32.mxu0 0.0
        %834 = vmatmul.mubr.f32.gmra.mxu0 %v767
        %v835 = vpop.f32.mrf.mxu0
        %v836 = vadd.f32 %v763, %v835
        %v837 = vpop.f32.mrf.mxu0
        %838 = vdwg.mxu0
        %v839 = vsel %vm485, %v836, 0.0
        %vm840 = vcmask 1044480
        %v841 = vsel %vm840, %v839, 0.0
        %842 = vst [vmem:[%s323] sm:$0xff] %v841
        %s843 = sand.u32 %s225, 1
        %s844 = scalar_lea.sflag [#allocation3], %s843
        %s845 = sand.u32 %s225, 1
        %s846 = smul.addr %s845, 8
        %s847 = scalar_lea.vmem [#allocation2], %s846
        // Predicated region
        $region57: #{tpu_custom_call.1} parent=55 // pred_check
          %p848 = pneg %p235
        $region58: #{tpu_custom_call.1} parent=55 // pred_check_branch
          %850 = sbr.rel (%p848) target = $region60
        $region59: #{tpu_custom_call.1} parent=55 // pred_region
          %s852 = ssub.s32 128, 128
          %853 = vsyncadd %s844, %s852
          %s854 = smul.addr %s23, 128
          %s855 = scalar_lea.hbm %s9, %s854
          %s857 = sshll.u32 %s847, 4
          %s858 = int_to_ptr.vmem [resolvable:$true] %s857
          %860 = dma.vmem_to_hbm [thread:$0]  %s858, 128, %s855, %s844
        $region60: #{tpu_custom_call.1} parent=55 // pred_fallthru
          _
      $region56: #{tpu_custom_call.1} parent=5 // pred_fallthru
        _
      %p861 = scmp.le.s32.totalorder 2, %s18
      // Predicated region
      $region61: #{tpu_custom_call.1} parent=5 // pred_check
        %p862 = pneg %p861
      $region62: #{tpu_custom_call.1} parent=5 // pred_check_branch
        %864 = sbr.rel (%p862) target = $region64
      $region63: #{tpu_custom_call.1} parent=5 // pred_region
        %s865 = ssub.s32 %s18, 2
        // Predicated region
        $region65: #{tpu_custom_call.1} parent=63 // pred_check
          %p866 = pneg %p241
        $region66: #{tpu_custom_call.1} parent=63 // pred_check_branch
          %868 = sbr.rel (%p866) target = $region68
        $region67: #{tpu_custom_call.1} parent=63 // pred_region
          %s869 = sand.u32 %s226, 1
          %s870 = scalar_lea.sflag [#allocation3], %s869
          %s871 = sand.u32 %s226, 1
          %s872 = smul.addr %s871, 8
          %s873 = scalar_lea.vmem [#allocation2], %s872
          %874 = dma.done %s870, 128
        $region68: #{tpu_custom_call.1} parent=63 // pred_fallthru
          _
      $region64: #{tpu_custom_call.1} parent=5 // pred_fallthru
        _
    $region6: #{tpu_custom_call.1} parent=1 // loop_footer
      %s22 = sadd.s32 1, %s18
    $region7: #{tpu_custom_call.1} parent=1 // loop_footer_branch
      %17 = sbr.rel target = $region3
    $region8: #{tpu_custom_call.1} parent=1 // loop_exit
      _
    %875 = vsyncpa [#allocation3], 1
    %s876 = scalar_lea.sflag [#allocation3], 1
    %877 = vsyncpa %s876, 1

</llo_original>
